<compile_context>
chip_gen: v7x
topology: tpu7x:2x2x1
jax: 0.10.0
libtpu: 0.0.40
codegen_flags: <defaults>
</compile_context>

<pallas_src>
import functools

import jax
import jax.numpy as jnp
from jax.experimental import pallas as pl
from jax.experimental.pallas import tpu as pltpu


def _scaled_tanh_kernel(x_ref, o_ref, *, scale, offset):
    x = x_ref[...].astype(jnp.float32)
    o_ref[...] = (jnp.tanh(x) * scale + offset).astype(o_ref.dtype)


def _sublane_multiple(dtype) -> int:
    # f32 -> 8, bf16 -> 16, int8/fp8 -> 32 (packed-tile minimum).
    return max(8, 32 // jnp.dtype(dtype).itemsize)


def scaled_tanh(x, low: float, high: float, *, target_block_bytes: int = 6 << 20):
    """low + (high - low) * (tanh(x) + 1) / 2, elementwise, via a Pallas TPU kernel."""
    orig_shape = x.shape
    dtype = x.dtype
    n = x.size
    if n == 0:
        return x

    scale = (high - low) * 0.5
    offset = low + scale
    itemsize = jnp.dtype(dtype).itemsize
    sub = _sublane_multiple(dtype)

    flat = x.reshape(-1)
    n_main = n - (n % 128)  # 128-aligned prefix handled by the kernel
    pieces = []

    if n_main:
        main = flat if n_main == n else flat[:n_main]

        # Lane-dense layout: widest W (multiple of 128) dividing the prefix.
        w = 128
        for cand in (1024, 512, 256, 128):
            if n_main % cand == 0:
                w = cand
                break
        rows = n_main // w
        x2d = main.reshape(rows, w)

        # Row-block size tm (multiple of `sub`): aim at target_block_bytes,
        # never below ~1 MiB per step, and use >= 4 grid steps when the tensor
        # is big enough (2 steps per v7x TensorCore, keeps DMA/compute overlapped).
        row_bytes = w * itemsize

        def rows_for(nbytes: int) -> int:
            return max(sub, (nbytes // row_bytes) // sub * sub)

        tm_cap = rows_for(target_block_bytes)
        tm_min = min(tm_cap, rows_for(1 << 20))
        quarter = (rows // 4) // sub * sub  # largest sub-multiple giving >= 4 steps
        if quarter >= tm_min:
            tm = min(tm_cap, quarter)       # >= 4 steps, each tm_min..tm_cap rows
        elif rows > tm_cap:
            tm = tm_cap
        else:
            tm = rows                       # single full-extent block
        grid = pl.cdiv(rows, tm)            # ragged last block masked by Pallas

        kernel = functools.partial(_scaled_tanh_kernel, scale=scale, offset=offset)
        out2d = pl.pallas_call(
            kernel,
            out_shape=jax.ShapeDtypeStruct((rows, w), dtype),
            grid_spec=pltpu.PrefetchScalarGridSpec(
                num_scalar_prefetch=0,
                grid=(grid,),
                in_specs=[pl.BlockSpec((tm, w), lambda i: (i, 0))],
                out_specs=pl.BlockSpec((tm, w), lambda i: (i, 0)),
            ),
            compiler_params=pltpu.CompilerParams(
                dimension_semantics=("parallel",),
                # Double-buffered 6 MiB blocks need ~24 MiB; 48 MiB gives
                # headroom on v5e/v6e (128 MiB) and stays under v7x's 64 MiB.
                vmem_limit_bytes=48 << 20,
            ),
            cost_estimate=pl.CostEstimate(
                flops=2 * n_main,
                transcendentals=n_main,
                bytes_accessed=2 * n_main * itemsize,
            ),
        )(x2d)
        pieces.append(out2d.reshape(-1))

    if n_main < n:
        # <128-element tail: plain jnp (cheaper than padding/un-padding the array).
        tail = flat[n_main:]
        pieces.append(
            (jnp.tanh(tail.astype(jnp.float32)) * scale + offset).astype(dtype)
        )

    out_flat = pieces[0] if len(pieces) == 1 else jnp.concatenate(pieces)
    return out_flat.reshape(orig_shape)


if __name__ == "__main__":
    # ScaledTanh(low=-1.5, high=2.5) — module has no learned parameters.
    low, high = -1.5, 2.5

    def ref_fn(x):
        x32 = x.astype(jnp.float32)
        return (low + (high - low) * (jnp.tanh(x32) + 1.0) / 2.0).astype(x.dtype)

    # 1) Aligned f32 case (the common NN case): single full-extent block.
    x = jax.random.normal(jax.random.PRNGKey(0), (2, 4, 16, 16), dtype=jnp.float32)
    out = jax.block_until_ready(scaled_tanh(x, low, high))
    assert out.shape == x.shape and out.dtype == x.dtype
    assert jnp.allclose(out, ref_fn(x), atol=1e-5, rtol=1e-5), "mismatch (aligned)"

    # 2) Unaligned element count: kernel on the 128-aligned prefix, jnp tail.
    x_odd = jax.random.normal(jax.random.PRNGKey(1), (3, 5, 17), dtype=jnp.float32)
    out_odd = jax.block_until_ready(scaled_tanh(x_odd, low, high))
    assert out_odd.shape == x_odd.shape and out_odd.dtype == x_odd.dtype
    assert jnp.allclose(out_odd, ref_fn(x_odd), atol=1e-5, rtol=1e-5), "mismatch (odd)"

    # 3) Multi-step cdiv grid with a ragged (Pallas-masked) last block.
    x_rag = jax.random.normal(jax.random.PRNGKey(2), (1000, 130), dtype=jnp.float32)
    out_rag = jax.block_until_ready(
        scaled_tanh(x_rag, low, high, target_block_bytes=64 << 10)
    )
    assert jnp.allclose(out_rag, ref_fn(x_rag), atol=1e-5, rtol=1e-5), "mismatch (ragged)"

    # 4) bf16 input (tanh + affine still computed in f32 in-kernel).
    x_bf = jax.random.normal(jax.random.PRNGKey(3), (4, 8, 32), dtype=jnp.bfloat16)
    out_bf = jax.block_until_ready(scaled_tanh(x_bf, low, high))
    assert out_bf.shape == x_bf.shape and out_bf.dtype == jnp.bfloat16
    assert jnp.allclose(
        out_bf.astype(jnp.float32), ref_fn(x_bf).astype(jnp.float32),
        atol=2e-2, rtol=2e-2,
    ), "mismatch (bf16)"

    print("KERNEL_OK")
</pallas_src>

<mosaic_0001>
module attributes {stable_mosaic.version = 11 : i64} {
  func.func @_scaled_tanh_kernel(%arg0: i32, %arg1: memref<2x1024xf32, #tpu.memory_space<vmem>>, %arg2: memref<2x1024xf32, #tpu.memory_space<vmem>>) attributes {dimension_semantics = [#tpu.dimension_semantics<parallel>], iteration_bounds = array<i64: 1>, scalar_prefetch = 0 : i64, scratch_operands = 0 : i64, tpu.core_type = #tpu.core_type<tc>, window_params = [{transform_indices = @transform_0, window_bounds = array<i64: 2, 1024>}, {transform_indices = @transform_1, window_bounds = array<i64: 2, 1024>}]} {
    %c0 = arith.constant 0 : index
    %c0_0 = arith.constant 0 : index
    %0 = vector.load %arg1[%c0, %c0_0] : memref<2x1024xf32, #tpu.memory_space<vmem>>, vector<2x1024xf32>
    %1 = math.tanh %0 : vector<2x1024xf32>
    %cst = arith.constant 2.000000e+00 : f32
    %2 = vector.broadcast %cst : f32 to vector<2x1024xf32>
    %3 = arith.mulf %1, %2 : vector<2x1024xf32>
    %cst_1 = arith.constant 5.000000e-01 : f32
    %4 = vector.broadcast %cst_1 : f32 to vector<2x1024xf32>
    %5 = arith.addf %3, %4 : vector<2x1024xf32>
    %c0_2 = arith.constant 0 : index
    %c0_3 = arith.constant 0 : index
    %6 = vector.load %arg2[%c0_2, %c0_3] : memref<2x1024xf32, #tpu.memory_space<vmem>>, vector<2x1024xf32>
    tpu.vector_store %arg2[%c0_2, %c0_3], %5 {strides = array<i32>} : memref<2x1024xf32, #tpu.memory_space<vmem>>, vector<2x1024xf32>,
    return
  }
  func.func @transform_0(%arg0: i32) -> (i32, i32) {
    %c0_i32 = arith.constant 0 : i32
    %c0_i32_0 = arith.constant 0 : i32
    return %arg0, %c0_i32 : i32, i32
  }
  func.func @transform_1(%arg0: i32) -> (i32, i32) {
    %c0_i32 = arith.constant 0 : i32
    %c0_i32_0 = arith.constant 0 : i32
    return %arg0, %c0_i32 : i32, i32
  }
}

</mosaic_0001>

<llo_original>
// kernel: tpu_custom_call.1
$region0: #{tpu_custom_call.1}
  #allocation0 [shape = 'u32[]', space=smem, size = 0x4, offset = 0x4, fixed_abs, tag = 'smem constant byte address 0x4 - core index']
  #allocation1 [shape = 'u32[144,128]{1,0:T(1,128)}', space=vmem, size = 0x12000, scoped, tag = 'internal scratch']
  %s0 = inlined_call_operand.hbm [shape: f32[2,1024], index: 0, kind: input, shape index: {}]
  %s1 = inlined_call_operand.hbm [shape: f32[2,1024], index: 1, kind: output, shape index: {}]
  %s2 = sld [smem:[#allocation0]]
  $region18: #{tpu_custom_call.1} parent=0
    _
  %s4 = ssub.s32 1, %s2
  %s5 = scalar_select 0, %s4, %s2
  $region1: #{tpu_custom_call.1} parent=0
    #allocation2 [shape = 'u8[8192]{0}', space=vmem, size = 0x2000, scoped, tag = 'input window, operand 0, single buffered']
    #allocation3 [shape = 's32[1]{0}', space=sflag, size = 0x4, scoped, tag = 'scoped memory for tpu_custom_call.1']
    #allocation4 [shape = 's32[1]{0}', space=sflag, size = 0x4, scoped, tag = 'scoped memory for tpu_custom_call.1']
    #allocation5 [shape = 'u8[8192]{0}', space=vmem, size = 0x2000, scoped, tag = 'output window, operand 0, single buffered']
    %6 = vsyncpa [#allocation3], 0
    %7 = vsyncpa [#allocation4], 0
    // Predicated region
    $region2: #{tpu_custom_call.1} parent=1 // pred_check
      _
    $region3: #{tpu_custom_call.1} parent=1 // pred_check_branch
      %9 = sbr.rel (0) target = $region5
    $region4: #{tpu_custom_call.1} parent=1 // pred_region
      %s11 = ssub.s32 256, 256
      %12 = vsyncadd [#allocation3], %s11
      %s14 = sshll.u32 [#allocation2], 4
      %s15 = int_to_ptr.vmem [resolvable:$true] %s14
      %17 = dma.hbm_to_vmem [thread:$0]  %s0, 256, %s15, [#allocation3]
    $region5: #{tpu_custom_call.1} parent=1 // pred_fallthru
      _
    // Predicated region
    $region6: #{tpu_custom_call.1} parent=1 // pred_check
      _
    $region7: #{tpu_custom_call.1} parent=1 // pred_check_branch
      %19 = sbr.rel (0) target = $region9
    $region8: #{tpu_custom_call.1} parent=1 // pred_region
      %20 = dma.done [#allocation3], 256
    $region9: #{tpu_custom_call.1} parent=1 // pred_fallthru
      _
    %v21 = vld [vmem:[#allocation2] sm:$0xff]
    %v22 = vld [vmem:[#allocation2 + $0x8] sm:$0xff]
    %v23 = vtanh.pop %v21
    %v24 = vtanh.pop %v22
    %v25 = vmul.f32 %v23, 2.0
    %v26 = vmul.f32 %v24, 2.0
    %v27 = vadd.f32 %v25, 0.5
    %v28 = vadd.f32 %v26, 0.5
    %29 = vst [vmem:[#allocation5] sm:$0xff] %v27
    %30 = vst [vmem:[#allocation5 + $0x8] sm:$0xff] %v28
    // Predicated region
    $region10: #{tpu_custom_call.1} parent=1 // pred_check
      _
    $region11: #{tpu_custom_call.1} parent=1 // pred_check_branch
      %32 = sbr.rel (0) target = $region13
    $region12: #{tpu_custom_call.1} parent=1 // pred_region
      %s34 = ssub.s32 256, 256
      %35 = vsyncadd [#allocation4], %s34
      %s37 = sshll.u32 [#allocation5], 4
      %s38 = int_to_ptr.vmem [resolvable:$true] %s37
      %40 = dma.vmem_to_hbm [thread:$0]  %s38, 256, %s1, [#allocation4]
    $region13: #{tpu_custom_call.1} parent=1 // pred_fallthru
      _
    // Predicated region
    $region14: #{tpu_custom_call.1} parent=1 // pred_check
      _
    $region15: #{tpu_custom_call.1} parent=1 // pred_check_branch
      %42 = sbr.rel (0) target = $region17
    $region16: #{tpu_custom_call.1} parent=1 // pred_region
      %43 = dma.done [#allocation4], 256
    $region17: #{tpu_custom_call.1} parent=1 // pred_fallthru
      _
    %44 = vsyncpa [#allocation3], 1
    %45 = vsyncpa [#allocation4], 1

</llo_original>
